<compile_context>
chip_gen: v7x
topology: tpu7x:2x2x1
jax: 0.10.0
libtpu: 0.0.40
codegen_flags: <defaults>
</compile_context>

<pallas_src>
import functools

import jax
import jax.numpy as jnp
from jax.experimental import pallas as pl
from jax.experimental.pallas import tpu as pltpu


def _instance_norm_kernel(x_ref, scale_ref, shift_ref, o_ref, *, eps, inv_spatial):
    # x_ref: (TR, S_pad) block of flattened (batch, channel) rows.
    x = x_ref[...].astype(jnp.float32)

    # Row statistics over the full (padded) spatial axis. Zero padding adds
    # nothing to the sums, so dividing by the true spatial size is exact.
    row_sum = jnp.sum(x, axis=-1, keepdims=True)          # (TR, 1)
    row_sum_sq = jnp.sum(x * x, axis=-1, keepdims=True)   # (TR, 1)
    mean = row_sum * inv_spatial
    mean_x2 = row_sum_sq * inv_spatial
    var = mean_x2 - mean * mean                           # matches the PyTorch formula

    inv_std = jax.lax.rsqrt(var + eps)                    # EUP, free under DMA traffic

    # Fused per-row affine: out = x * a + b
    scale = scale_ref[...].astype(jnp.float32)            # (TR, 1)
    shift = shift_ref[...].astype(jnp.float32)            # (TR, 1)
    a = scale * inv_std
    b = shift - mean * a

    o_ref[...] = (x * a + b).astype(o_ref.dtype)


def instance_norm(x, scale, shift, *, eps=1e-5, target_block_bytes=1 << 20):
    """Instance norm over [B, C, *spatial], matching the PyTorch module forward."""
    x_shape = x.shape
    B, C = x_shape[0], x_shape[1]
    S = 1
    for d in x_shape[2:]:
        S *= d

    R = B * C
    x2 = x.reshape(R, S)

    # Per-row affine parameters (row (b, c) uses scale[c] / shift[c]).
    scale_rows = jnp.broadcast_to(scale.reshape(1, C), (B, C)).reshape(R, 1)
    shift_rows = jnp.broadcast_to(shift.reshape(1, C), (B, C)).reshape(R, 1)
    scale_rows = scale_rows.astype(jnp.float32)
    shift_rows = shift_rows.astype(jnp.float32)

    # Lane-dense spatial axis: pad S up to a multiple of 128.
    s_pad = max(128, pl.cdiv(S, 128) * 128)

    # Row tile: multiple of 8 sublanes, sized so one x block is ~target_block_bytes,
    # but never larger than the (sublane-rounded) number of rows.
    itemsize = jnp.dtype(x.dtype).itemsize
    sublane = 8
    rows_for_target = max(1, target_block_bytes // (s_pad * itemsize))
    tr = max(sublane, (rows_for_target // sublane) * sublane)
    tr = min(tr, pl.cdiv(R, sublane) * sublane)
    r_pad = pl.cdiv(R, tr) * tr

    # Zero-pad rows / lanes (padded rows produce finite garbage that is sliced off).
    x2p = jnp.pad(x2, ((0, r_pad - R), (0, s_pad - S)))
    scale_p = jnp.pad(scale_rows, ((0, r_pad - R), (0, 0)))
    shift_p = jnp.pad(shift_rows, ((0, r_pad - R), (0, 0)))

    kernel = functools.partial(
        _instance_norm_kernel, eps=float(eps), inv_spatial=1.0 / float(S)
    )

    out_p = pl.pallas_call(
        kernel,
        out_shape=jax.ShapeDtypeStruct((r_pad, s_pad), x.dtype),
        grid_spec=pltpu.PrefetchScalarGridSpec(
            num_scalar_prefetch=0,
            grid=(r_pad // tr,),
            in_specs=[
                pl.BlockSpec((tr, s_pad), lambda r: (r, 0)),
                pl.BlockSpec((tr, 1), lambda r: (r, 0)),
                pl.BlockSpec((tr, 1), lambda r: (r, 0)),
            ],
            out_specs=pl.BlockSpec((tr, s_pad), lambda r: (r, 0)),
        ),
        compiler_params=pltpu.CompilerParams(
            dimension_semantics=("parallel",),
            # ~1 MiB blocks, double-buffered in+out ≈ 4-8 MiB: plenty of headroom
            # on every generation (incl. v7x's 64 MiB total / 32 MiB scoped VMEM).
            vmem_limit_bytes=32 * 1024 * 1024,
        ),
    )(x2p, scale_p, shift_p)

    return out_p[:R, :S].reshape(x_shape)


def instance_norm_ref(x, scale, shift, *, eps=1e-5):
    """Pure-JAX reference mirroring the PyTorch forward."""
    x_shape = x.shape
    B, C = x_shape[0], x_shape[1]
    xf = x.reshape(B, C, -1).astype(jnp.float32)
    mean = jnp.mean(xf, axis=-1, keepdims=True)
    mean_x2 = jnp.mean(xf * xf, axis=-1, keepdims=True)
    var = mean_x2 - mean * mean
    x_norm = (xf - mean) / jnp.sqrt(var + eps)
    x_norm = scale.reshape(1, C, 1) * x_norm + shift.reshape(1, C, 1)
    return x_norm.reshape(x_shape).astype(x.dtype)


if __name__ == "__main__":
    key = jax.random.PRNGKey(0)
    B, C, H, W = 2, 4, 16, 16

    x = jax.random.normal(key, (B, C, H, W), dtype=jnp.float32)
    # Deterministic parameter init, same as nn.Parameter(torch.ones/zeros(channels)).
    scale = jnp.ones((C,), dtype=jnp.float32)
    shift = jnp.zeros((C,), dtype=jnp.float32)

    out = instance_norm(x, scale, shift, eps=1e-5)
    out = jax.block_until_ready(out)

    ref = instance_norm_ref(x, scale, shift, eps=1e-5)
    assert out.shape == x.shape
    assert jnp.allclose(out, ref, atol=1e-5, rtol=1e-5), "mismatch vs reference"

    print("KERNEL_OK")
</pallas_src>

<mosaic_0001>
module attributes {stable_mosaic.version = 11 : i64} {
  func.func @_instance_norm_kernel(%arg0: i32, %arg1: memref<8x256xf32, #tpu.memory_space<vmem>>, %arg2: memref<8x1xf32, #tpu.memory_space<vmem>>, %arg3: memref<8x1xf32, #tpu.memory_space<vmem>>, %arg4: memref<8x256xf32, #tpu.memory_space<vmem>>) attributes {dimension_semantics = [#tpu.dimension_semantics<parallel>], iteration_bounds = array<i64: 1>, scalar_prefetch = 0 : i64, scratch_operands = 0 : i64, tpu.core_type = #tpu.core_type<tc>, window_params = [{transform_indices = @transform_0, window_bounds = array<i64: 8, 256>}, {transform_indices = @transform_1, window_bounds = array<i64: 8, 1>}, {transform_indices = @transform_2, window_bounds = array<i64: 8, 1>}, {transform_indices = @transform_3, window_bounds = array<i64: 8, 256>}]} {
    %c0 = arith.constant 0 : index
    %c0_0 = arith.constant 0 : index
    %0 = vector.load %arg1[%c0, %c0_0] : memref<8x256xf32, #tpu.memory_space<vmem>>, vector<8x256xf32>
    %cst = arith.constant dense<0.000000e+00> : vector<8xf32>
    %1 = vector.multi_reduction <add>, %0, %cst [1] : vector<8x256xf32> to vector<8xf32>
    %2 = vector.shape_cast %1 : vector<8xf32> to vector<8x1xf32>
    %3 = arith.mulf %0, %0 : vector<8x256xf32>
    %cst_1 = arith.constant dense<0.000000e+00> : vector<8xf32>
    %4 = vector.multi_reduction <add>, %3, %cst_1 [1] : vector<8x256xf32> to vector<8xf32>
    %5 = vector.shape_cast %4 : vector<8xf32> to vector<8x1xf32>
    %cst_2 = arith.constant 3.906250e-03 : f32
    %6 = vector.broadcast %cst_2 : f32 to vector<8x1xf32>
    %7 = arith.mulf %2, %6 : vector<8x1xf32>
    %cst_3 = arith.constant 3.906250e-03 : f32
    %8 = vector.broadcast %cst_3 : f32 to vector<8x1xf32>
    %9 = arith.mulf %5, %8 : vector<8x1xf32>
    %10 = arith.mulf %7, %7 : vector<8x1xf32>
    %11 = arith.subf %9, %10 : vector<8x1xf32>
    %cst_4 = arith.constant 9.99999974E-6 : f32
    %12 = vector.broadcast %cst_4 : f32 to vector<8x1xf32>
    %13 = arith.addf %11, %12 : vector<8x1xf32>
    %14 = math.rsqrt %13 : vector<8x1xf32>
    %c0_5 = arith.constant 0 : index
    %c0_6 = arith.constant 0 : index
    %15 = vector.load %arg2[%c0_5, %c0_6] : memref<8x1xf32, #tpu.memory_space<vmem>>, vector<8x1xf32>
    %c0_7 = arith.constant 0 : index
    %c0_8 = arith.constant 0 : index
    %16 = vector.load %arg3[%c0_7, %c0_8] : memref<8x1xf32, #tpu.memory_space<vmem>>, vector<8x1xf32>
    %17 = arith.mulf %15, %14 : vector<8x1xf32>
    %18 = arith.mulf %7, %17 : vector<8x1xf32>
    %19 = arith.subf %16, %18 : vector<8x1xf32>
    %20 = vector.broadcast %17 : vector<8x1xf32> to vector<8x256xf32>
    %21 = arith.mulf %0, %20 : vector<8x256xf32>
    %22 = vector.broadcast %19 : vector<8x1xf32> to vector<8x256xf32>
    %23 = arith.addf %21, %22 : vector<8x256xf32>
    %c0_9 = arith.constant 0 : index
    %c0_10 = arith.constant 0 : index
    %24 = vector.load %arg4[%c0_9, %c0_10] : memref<8x256xf32, #tpu.memory_space<vmem>>, vector<8x256xf32>
    tpu.vector_store %arg4[%c0_9, %c0_10], %23 {strides = array<i32>} : memref<8x256xf32, #tpu.memory_space<vmem>>, vector<8x256xf32>,
    return
  }
  func.func @transform_0(%arg0: i32) -> (i32, i32) {
    %c0_i32 = arith.constant 0 : i32
    %c0_i32_0 = arith.constant 0 : i32
    return %arg0, %c0_i32 : i32, i32
  }
  func.func @transform_1(%arg0: i32) -> (i32, i32) {
    %c0_i32 = arith.constant 0 : i32
    %c0_i32_0 = arith.constant 0 : i32
    return %arg0, %c0_i32 : i32, i32
  }
  func.func @transform_2(%arg0: i32) -> (i32, i32) {
    %c0_i32 = arith.constant 0 : i32
    %c0_i32_0 = arith.constant 0 : i32
    return %arg0, %c0_i32 : i32, i32
  }
  func.func @transform_3(%arg0: i32) -> (i32, i32) {
    %c0_i32 = arith.constant 0 : i32
    %c0_i32_0 = arith.constant 0 : i32
    return %arg0, %c0_i32 : i32, i32
  }
}

</mosaic_0001>

<llo_original>
// kernel: tpu_custom_call.1
$region0: #{tpu_custom_call.1}
  #allocation0 [shape = 'u32[]', space=smem, size = 0x4, offset = 0x4, fixed_abs, tag = 'smem constant byte address 0x4 - core index']
  #allocation1 [shape = 'u32[144,128]{1,0:T(1,128)}', space=vmem, size = 0x12000, scoped, tag = 'internal scratch']
  %s0 = inlined_call_operand.vmem [shape: f32[8,256], index: 0, kind: input, shape index: {}]
  %s1 = inlined_call_operand.vmem [shape: f32[8,1], index: 1, kind: input, shape index: {}]
  %s2 = inlined_call_operand.vmem [shape: f32[8,1], index: 2, kind: input, shape index: {}]
  %s3 = inlined_call_operand.hbm [shape: f32[8,256], index: 3, kind: output, shape index: {}]
  %s4 = sld [smem:[#allocation0]]
  $region22: #{tpu_custom_call.1} parent=0
    _
  %s6 = ssub.s32 1, %s4
  %s7 = scalar_select 0, %s6, %s4
  $region1: #{tpu_custom_call.1} parent=0
    #allocation2 [shape = 'u8[8192]{0}', space=vmem, size = 0x2000, scoped, tag = 'output window, operand 0, single buffered']
    #allocation3 [shape = 's32[1]{0}', space=sflag, size = 0x4, scoped, tag = 'scoped memory for tpu_custom_call.1']
    %8 = vsyncpa [#allocation3], 0
    // Predicated region
    $region2: #{tpu_custom_call.1} parent=1 // pred_check
      _
    $region3: #{tpu_custom_call.1} parent=1 // pred_check_branch
      %10 = sbr.rel (0) target = $region5
    $region4: #{tpu_custom_call.1} parent=1 // pred_region
      _
    $region5: #{tpu_custom_call.1} parent=1 // pred_fallthru
      _
    // Predicated region
    $region6: #{tpu_custom_call.1} parent=1 // pred_check
      _
    $region7: #{tpu_custom_call.1} parent=1 // pred_check_branch
      %12 = sbr.rel (0) target = $region9
    $region8: #{tpu_custom_call.1} parent=1 // pred_region
      _
    $region9: #{tpu_custom_call.1} parent=1 // pred_fallthru
      _
    // Predicated region
    $region10: #{tpu_custom_call.1} parent=1 // pred_check
      _
    $region11: #{tpu_custom_call.1} parent=1 // pred_check_branch
      %14 = sbr.rel (0) target = $region13
    $region12: #{tpu_custom_call.1} parent=1 // pred_region
      _
    $region13: #{tpu_custom_call.1} parent=1 // pred_fallthru
      _
    %v15 = vld [vmem:[%s0] sm:$0xff]
    %v16 = vld [vmem:[%s0 + $0x8] sm:$0xff]
    %v17 = vadd.f32 %v15, %v16
    %18 = vadd.xlane.f32.xlu0 %v17
    %v19 = vpop.xlane.xlu0 %18
    %v20 = vmul.f32 %v15, %v15
    %v21 = vmul.f32 %v16, %v16
    %v22 = vadd.f32 %v20, %v21
    %23 = vadd.xlane.f32.xlu0 %v22
    %v24 = vpop.xlane.xlu0 %23
    %v25 = vmul.f32 %v19, 0.00390625
    %v26 = vmul.f32 %v24, 0.00390625
    %v27 = vmul.f32 %v25, %v25
    %v28 = vsub.f32 %v26, %v27
    %v29 = vadd.f32 %v28, 1e-05
    %v30 = vrsqrt.pop %v29
    %v31 = vld [vmem:[%s1] sm:$0xff]
    %v32 = vld [vmem:[%s2] sm:$0xff]
    %v33 = vmul.f32 %v31, %v30
    %v34 = vmul.f32 %v25, %v33
    %v35 = vsub.f32 %v32, %v34
    %37 = vset.pattern.permute.xlu0 0
    %38 = vperm.xlu0 %37, %v33
    %v39 = vpop.permute.xlu0 %38
    %v41 = vmul.f32 %v15, %v39
    %v42 = vmul.f32 %v16, %v39
    %44 = vset.pattern.permute.xlu0 0
    %45 = vperm.xlu0 %44, %v35
    %v46 = vpop.permute.xlu0 %45
    %v48 = vadd.f32 %v41, %v46
    %v49 = vadd.f32 %v42, %v46
    %50 = vst [vmem:[#allocation2] sm:$0xff] %v48
    %51 = vst [vmem:[#allocation2 + $0x8] sm:$0xff] %v49
    // Predicated region
    $region14: #{tpu_custom_call.1} parent=1 // pred_check
      _
    $region15: #{tpu_custom_call.1} parent=1 // pred_check_branch
      %53 = sbr.rel (0) target = $region17
    $region16: #{tpu_custom_call.1} parent=1 // pred_region
      %s55 = ssub.s32 256, 256
      %56 = vsyncadd [#allocation3], %s55
      %s58 = sshll.u32 [#allocation2], 4
      %s59 = int_to_ptr.vmem [resolvable:$true] %s58
      %61 = dma.vmem_to_hbm [thread:$0]  %s59, 256, %s3, [#allocation3]
    $region17: #{tpu_custom_call.1} parent=1 // pred_fallthru
      _
    // Predicated region
    $region18: #{tpu_custom_call.1} parent=1 // pred_check
      _
    $region19: #{tpu_custom_call.1} parent=1 // pred_check_branch
      %63 = sbr.rel (0) target = $region21
    $region20: #{tpu_custom_call.1} parent=1 // pred_region
      %64 = dma.done [#allocation3], 256
    $region21: #{tpu_custom_call.1} parent=1 // pred_fallthru
      _
    %65 = vsyncpa [#allocation3], 1

</llo_original>
